<compile_context>
chip_gen: v7x
topology: tpu7x:2x2x1
jax: 0.10.0
libtpu: 0.0.40
codegen_flags: <defaults>
</compile_context>

<pallas_src>
import functools

import jax
import jax.numpy as jnp
from jax.experimental import pallas as pl
from jax.experimental.pallas import tpu as pltpu

HEADS = 8
DIM_HEAD = 32
INNER = HEADS * DIM_HEAD  # 256


def _qsca_kernel(x_tok_ref, a_ref,
                 w_a_ref, b_a_ref,
                 w_kv_ref,
                 w_o_ref, b_o_ref,
                 segsum_ref, expand_ref,
                 o_ref, a_out_ref):
    """One grid step == Bt batch elements.

    x_tok_ref : (Bt, N, C_in)        pooled visual tokens (bf16)
    a_ref     : (Bt, 1, C_in)        raw audio feature (bf16)
    w_a_ref   : (C_in, INNER+C_out)  [w_fc @ w_q | w_fc]  (bf16)
    b_a_ref   : (1, INNER+C_out)     [b_fc @ w_q | b_fc]  (f32)
    w_kv_ref  : (C_in, 2*INNER)      [w_k | w_v]          (bf16)
    segsum_ref: (INNER, HEADS)       per-head segment sum, scale folded (bf16)
    expand_ref: (HEADS, INNER)       0/1 head -> 32-lane broadcast (bf16)
    o_ref     : (Bt, N, C_in)        query-selected visual tokens (bf16)
    a_out_ref : (Bt, 1, C_out)       updated audio embedding (f32)
    """
    bt, n, c_in = x_tok_ref.shape
    c_out = b_o_ref.shape[-1]

    x3 = x_tok_ref[...]                                   # (Bt, N, C_in) bf16
    x2 = x3.reshape(bt * n, c_in)                         # (Bt*N, C_in)  bf16
    a2 = a_ref[...].reshape(bt, c_in)                     # (Bt, C_in)    bf16

    # --- fused audio path: one matmul gives both q and a_emb ---------------
    aq = jnp.dot(a2, w_a_ref[...],
                 preferred_element_type=jnp.float32) + b_a_ref[...]  # (Bt, INNER+C_out)
    q = aq[:, :INNER]                                     # (Bt, INNER)  f32 (lane-aligned)
    a_emb = aq[:, INNER:]                                 # (Bt, C_out)  f32 (start = 256)

    # --- fused K/V projection: one bf16 MXU matmul over all Bt*N tokens ----
    kv = jnp.dot(x2, w_kv_ref[...],
                 preferred_element_type=jnp.float32)      # (Bt*N, 2*INNER)
    k3 = kv[:, :INNER].reshape(bt, n, INNER)              # (Bt, N, INNER)
    v3 = kv[:, INNER:].reshape(bt, n, INNER)              # (Bt, N, INNER)

    # --- all-head scores in one shot (scale folded into segsum) ------------
    prod = (k3 * q[:, None, :]).astype(jnp.bfloat16)      # (Bt, N, INNER)
    s3 = jnp.dot(prod.reshape(bt * n, INNER), segsum_ref[...],
                 preferred_element_type=jnp.float32).reshape(bt, n, HEADS)

    # one softmax over the token axis for all 8 heads at once
    # TODO(synk): at production N (49..196), lay scores out as (Bt, HEADS, N)
    # so the softmax runs with N on the lane axis instead of HEADS (8/128).
    m = jnp.max(s3, axis=1, keepdims=True)                # (Bt, 1, HEADS)
    e = jnp.exp(s3 - m)
    den = jnp.sum(e, axis=1, keepdims=True)
    attn = e * pl.reciprocal(den, approx=True)            # (Bt, N, HEADS) f32

    # --- attended values: expand heads back to their 32 lanes via bf16 MXU --
    attn_exp = jnp.dot(attn.reshape(bt * n, HEADS).astype(jnp.bfloat16),
                       expand_ref[...],
                       preferred_element_type=jnp.float32).reshape(bt, n, INNER)
    ctx = jnp.sum(attn_exp * v3, axis=1)                  # (Bt, INNER)

    a_new = a_emb + jnp.dot(ctx.astype(jnp.bfloat16), w_o_ref[...],
                            preferred_element_type=jnp.float32) + b_o_ref[...]

    # --- query-selected spatial re-weighting (head-averaged attention) ------
    w_sp = jnp.sum(attn, axis=-1, keepdims=True) * (1.0 / HEADS)   # (Bt, N, 1)
    o_ref[...] = (x3.astype(jnp.float32) * w_sp).astype(o_ref.dtype)
    a_out_ref[...] = a_new.reshape(bt, 1, c_out).astype(a_out_ref.dtype)


def init_qsca_params(key, in_channel, out_channel):
    ks = jax.random.split(key, 6)
    s = 0.02
    return {
        "w_fc": (jax.random.normal(ks[0], (in_channel, out_channel)) * s).astype(jnp.float32),
        "b_fc": jnp.zeros((1, out_channel), jnp.float32),
        "w_q": (jax.random.normal(ks[1], (out_channel, INNER)) * s).astype(jnp.float32),
        "w_k": (jax.random.normal(ks[2], (in_channel, INNER)) * s).astype(jnp.float32),
        "w_v": (jax.random.normal(ks[3], (in_channel, INNER)) * s).astype(jnp.float32),
        "w_o": (jax.random.normal(ks[4], (INNER, out_channel)) * s).astype(jnp.float32),
        "b_o": jnp.zeros((1, out_channel), jnp.float32),
    }


@functools.partial(jax.jit, static_argnames=("size",))
def qsca_forward(x, a, params, size, mask=None):
    """x: (B, C_in, H, W) NCHW, a: (B, C_in).  Returns (o, a_new)."""
    del mask  # TODO(synk): attention mask support (reference calls with mask=None)
    B, C_in, H, W = x.shape
    C_out = params["w_fc"].shape[1]
    N = size * size

    # AdaptiveAvgPool2d(size): exact for H, W divisible by size (reshape-mean).
    # TODO(synk): at production PVT shapes, fuse pool + NCHW->token transpose
    # into the kernel (feed NCHW blocks, pool via constant averaging matmul)
    # to avoid this HBM round trip of x (the dominant production-shape cost).
    x_p = x.reshape(B, C_in, size, H // size, size, W // size).mean(axis=(3, 5))
    x_tok = jnp.transpose(x_p.reshape(B, C_in, N), (0, 2, 1)).astype(jnp.bfloat16)  # (B,N,C)
    a_in = a.reshape(B, 1, C_in).astype(jnp.bfloat16)

    # --- fused / bf16 weights (accumulation stays f32 inside the kernel) ----
    w_fc = params["w_fc"]
    w_q = params["w_q"]
    w_fcq = jnp.dot(w_fc, w_q)                              # (C_in, INNER)  f32
    b_q = jnp.dot(params["b_fc"], w_q)                      # (1, INNER)     f32
    # order [q-block | fc-block] so both lane slices start 128-aligned (0, 256)
    w_a = jnp.concatenate([w_fcq, w_fc], axis=1).astype(jnp.bfloat16)       # (C_in, INNER+C_out)
    b_a = jnp.concatenate([b_q, params["b_fc"]], axis=1).astype(jnp.float32)
    w_kv = jnp.concatenate([params["w_k"], params["w_v"]], axis=1).astype(jnp.bfloat16)
    w_o = params["w_o"].astype(jnp.bfloat16)
    b_o = params["b_o"].astype(jnp.float32)

    # Constant matrices (bf16; 0/1 entries exact, scale folded into seg_sum):
    #   expand  (HEADS, INNER): broadcast a head's attention across its 32 lanes
    #   seg_sum (INNER, HEADS): per-head segment sum of lane products, pre-scaled
    scale = DIM_HEAD ** -0.5
    expand_f32 = jnp.repeat(jnp.eye(HEADS, dtype=jnp.float32), DIM_HEAD, axis=1)
    seg_sum = (expand_f32.T * scale).astype(jnp.bfloat16)
    expand = expand_f32.astype(jnp.bfloat16)

    # Grid: one step by default (v5e/v6e are single-TensorCore; splitting only
    # adds ~0.35us/step and halves MXU rows).  Split into 2 "parallel" steps
    # (v7x megacore) only when each step still has >= 64 MXU rows of work.
    steps = 2 if (B % 2 == 0 and (B // 2) * N >= 64) else 1
    bt = B // steps

    full2 = lambda arr: pl.BlockSpec(arr.shape, lambda i: (0, 0))

    o_tok, a_new = pl.pallas_call(
        _qsca_kernel,
        grid=(steps,),
        in_specs=[
            pl.BlockSpec((bt, N, C_in), lambda i: (i, 0, 0)),
            pl.BlockSpec((bt, 1, C_in), lambda i: (i, 0, 0)),
            full2(w_a), full2(b_a), full2(w_kv), full2(w_o), full2(b_o),
            full2(seg_sum), full2(expand),
        ],
        out_specs=[
            pl.BlockSpec((bt, N, C_in), lambda i: (i, 0, 0)),
            pl.BlockSpec((bt, 1, C_out), lambda i: (i, 0, 0)),
        ],
        out_shape=(
            jax.ShapeDtypeStruct((B, N, C_in), jnp.bfloat16),
            jax.ShapeDtypeStruct((B, 1, C_out), jnp.float32),
        ),
        compiler_params=pltpu.CompilerParams(
            dimension_semantics=("parallel",)),
        # VMEM: with spread/x_flat removed, all blocks total well under the
        # default scoped limit on every generation; no explicit vmem_limit needed.
    )(x_tok, a_in, w_a, b_a, w_kv, w_o, b_o, seg_sum, expand)

    # back to NCHW and bilinear upsample to (H, W)
    # (jax.image.resize 'bilinear' == F.interpolate bilinear, align_corners=False)
    o_small = jnp.transpose(o_tok.astype(jnp.float32), (0, 2, 1)).reshape(
        B, C_in, size, size)
    o = jax.image.resize(o_small, (B, C_in, H, W), method="bilinear")
    return o, a_new.reshape(B, C_out)


if __name__ == "__main__":
    key = jax.random.PRNGKey(0)
    k_x, k_a, k_p = jax.random.split(key, 3)

    B, C_in, C_out, H, W, SIZE = 2, 32, 32, 16, 16, 4

    x = jax.random.normal(k_x, (B, C_in, H, W), dtype=jnp.float32)
    a = jax.random.normal(k_a, (B, C_in), dtype=jnp.float32)
    params = init_qsca_params(k_p, C_in, C_out)

    o, a_new = qsca_forward(x, a, params, SIZE)
    jax.block_until_ready((o, a_new))

    assert o.shape == (B, C_in, H, W), o.shape
    assert a_new.shape == (B, C_out), a_new.shape
    print("KERNEL_OK")
</pallas_src>

<mosaic_0001>
module attributes {stable_mosaic.version = 11 : i64} {
  func.func @_qsca_kernel(%arg0: i32, %arg1: memref<2x16x32xbf16, #tpu.memory_space<vmem>>, %arg2: memref<2x1x32xbf16, #tpu.memory_space<vmem>>, %arg3: memref<32x288xbf16, #tpu.memory_space<vmem>>, %arg4: memref<1x288xf32, #tpu.memory_space<vmem>>, %arg5: memref<32x512xbf16, #tpu.memory_space<vmem>>, %arg6: memref<256x32xbf16, #tpu.memory_space<vmem>>, %arg7: memref<1x32xf32, #tpu.memory_space<vmem>>, %arg8: memref<256x8xbf16, #tpu.memory_space<vmem>>, %arg9: memref<8x256xbf16, #tpu.memory_space<vmem>>, %arg10: memref<2x16x32xbf16, #tpu.memory_space<vmem>>, %arg11: memref<2x1x32xf32, #tpu.memory_space<vmem>>) attributes {dimension_semantics = [#tpu.dimension_semantics<parallel>], iteration_bounds = array<i64: 1>, scalar_prefetch = 0 : i64, scratch_operands = 0 : i64, tpu.core_type = #tpu.core_type<tc>, window_params = [{transform_indices = @transform_0, window_bounds = array<i64: 2, 16, 32>}, {transform_indices = @transform_1, window_bounds = array<i64: 2, 1, 32>}, {pipeline_mode = #tpu.pipeline_mode<synchronous>, transform_indices = @transform_2, window_bounds = array<i64: 32, 288>}, {pipeline_mode = #tpu.pipeline_mode<synchronous>, transform_indices = @transform_3, window_bounds = array<i64: 1, 288>}, {pipeline_mode = #tpu.pipeline_mode<synchronous>, transform_indices = @transform_4, window_bounds = array<i64: 32, 512>}, {pipeline_mode = #tpu.pipeline_mode<synchronous>, transform_indices = @transform_5, window_bounds = array<i64: 256, 32>}, {pipeline_mode = #tpu.pipeline_mode<synchronous>, transform_indices = @transform_6, window_bounds = array<i64: 1, 32>}, {pipeline_mode = #tpu.pipeline_mode<synchronous>, transform_indices = @transform_7, window_bounds = array<i64: 256, 8>}, {pipeline_mode = #tpu.pipeline_mode<synchronous>, transform_indices = @transform_8, window_bounds = array<i64: 8, 256>}, {transform_indices = @transform_9, window_bounds = array<i64: 2, 16, 32>}, {transform_indices = @transform_10, window_bounds = array<i64: 2, 1, 32>}]} {
    %c0 = arith.constant 0 : index
    %c0_0 = arith.constant 0 : index
    %c0_1 = arith.constant 0 : index
    %0 = vector.load %arg1[%c0, %c0_0, %c0_1] : memref<2x16x32xbf16, #tpu.memory_space<vmem>>, vector<2x16x32xbf16>
    %1 = vector.shape_cast %0 : vector<2x16x32xbf16> to vector<32x32xbf16>
    %c0_2 = arith.constant 0 : index
    %c0_3 = arith.constant 0 : index
    %c0_4 = arith.constant 0 : index
    %2 = vector.load %arg2[%c0_2, %c0_3, %c0_4] : memref<2x1x32xbf16, #tpu.memory_space<vmem>>, vector<2x1x32xbf16>
    %3 = vector.shape_cast %2 : vector<2x1x32xbf16> to vector<2x32xbf16>
    %c0_5 = arith.constant 0 : index
    %c0_6 = arith.constant 0 : index
    %4 = vector.load %arg3[%c0_5, %c0_6] : memref<32x288xbf16, #tpu.memory_space<vmem>>, vector<32x288xbf16>
    %cst = arith.constant dense<0.000000e+00> : vector<2x288xf32>
    %5 = tpu.matmul %3, %4, %cst {dimension_numbers = #tpu.dot_dimension_numbers<[1], [0], [0], [1], [0, 0, 1, 1], [], []>} : vector<2x32xbf16>, vector<32x288xbf16>, vector<2x288xf32> -> vector<2x288xf32>
    %c0_7 = arith.constant 0 : index
    %c0_8 = arith.constant 0 : index
    %6 = vector.load %arg4[%c0_7, %c0_8] : memref<1x288xf32, #tpu.memory_space<vmem>>, vector<1x288xf32>
    %7 = vector.broadcast %6 : vector<1x288xf32> to vector<2x288xf32>
    %8 = arith.addf %5, %7 : vector<2x288xf32>
    %9 = vector.extract_strided_slice %8 {offsets = [0, 0], sizes = [2, 256], strides = [1, 1]} : vector<2x288xf32> to vector<2x256xf32>
    %10 = vector.extract_strided_slice %8 {offsets = [0, 256], sizes = [2, 32], strides = [1, 1]} : vector<2x288xf32> to vector<2x32xf32>
    %c0_9 = arith.constant 0 : index
    %c0_10 = arith.constant 0 : index
    %11 = vector.load %arg5[%c0_9, %c0_10] : memref<32x512xbf16, #tpu.memory_space<vmem>>, vector<32x512xbf16>
    %cst_11 = arith.constant dense<0.000000e+00> : vector<32x512xf32>
    %12 = tpu.matmul %1, %11, %cst_11 {dimension_numbers = #tpu.dot_dimension_numbers<[1], [0], [0], [1], [0, 0, 1, 1], [], []>} : vector<32x32xbf16>, vector<32x512xbf16>, vector<32x512xf32> -> vector<32x512xf32>
    %13 = vector.extract_strided_slice %12 {offsets = [0, 0], sizes = [32, 256], strides = [1, 1]} : vector<32x512xf32> to vector<32x256xf32>
    %14 = vector.shape_cast %13 : vector<32x256xf32> to vector<2x16x256xf32>
    %15 = vector.extract_strided_slice %12 {offsets = [0, 256], sizes = [32, 256], strides = [1, 1]} : vector<32x512xf32> to vector<32x256xf32>
    %16 = vector.shape_cast %15 : vector<32x256xf32> to vector<2x16x256xf32>
    %17 = vector.shape_cast %9 : vector<2x256xf32> to vector<2x1x256xf32>
    %18 = vector.broadcast %17 : vector<2x1x256xf32> to vector<2x16x256xf32>
    %19 = arith.mulf %14, %18 : vector<2x16x256xf32>
    %20 = arith.truncf %19 : vector<2x16x256xf32> to vector<2x16x256xbf16>
    %21 = vector.shape_cast %20 : vector<2x16x256xbf16> to vector<32x256xbf16>
    %c0_12 = arith.constant 0 : index
    %c0_13 = arith.constant 0 : index
    %22 = vector.load %arg8[%c0_12, %c0_13] : memref<256x8xbf16, #tpu.memory_space<vmem>>, vector<256x8xbf16>
    %cst_14 = arith.constant dense<0.000000e+00> : vector<32x8xf32>
    %23 = tpu.matmul %21, %22, %cst_14 {dimension_numbers = #tpu.dot_dimension_numbers<[1], [0], [0], [1], [0, 0, 1, 1], [], []>} : vector<32x256xbf16>, vector<256x8xbf16>, vector<32x8xf32> -> vector<32x8xf32>
    %24 = vector.shape_cast %23 : vector<32x8xf32> to vector<2x16x8xf32>
    %cst_15 = arith.constant dense<0xFF800000> : vector<2x8xf32>
    %25 = vector.multi_reduction <maximumf>, %24, %cst_15 [1] : vector<2x16x8xf32> to vector<2x8xf32>
    %26 = vector.shape_cast %25 : vector<2x8xf32> to vector<2x1x8xf32>
    %27 = vector.broadcast %26 : vector<2x1x8xf32> to vector<2x16x8xf32>
    %28 = arith.subf %24, %27 : vector<2x16x8xf32>
    %29 = math.exp %28 : vector<2x16x8xf32>
    %cst_16 = arith.constant dense<0.000000e+00> : vector<2x8xf32>
    %30 = vector.multi_reduction <add>, %29, %cst_16 [1] : vector<2x16x8xf32> to vector<2x8xf32>
    %31 = vector.shape_cast %30 : vector<2x8xf32> to vector<2x1x8xf32>
    %32 = tpu.reciprocal %31 {approx = true} : vector<2x1x8xf32> -> vector<2x1x8xf32>
    %33 = vector.broadcast %32 : vector<2x1x8xf32> to vector<2x16x8xf32>
    %34 = arith.mulf %29, %33 : vector<2x16x8xf32>
    %35 = vector.shape_cast %34 : vector<2x16x8xf32> to vector<32x8xf32>
    %36 = arith.truncf %35 : vector<32x8xf32> to vector<32x8xbf16>
    %c0_17 = arith.constant 0 : index
    %c0_18 = arith.constant 0 : index
    %37 = vector.load %arg9[%c0_17, %c0_18] : memref<8x256xbf16, #tpu.memory_space<vmem>>, vector<8x256xbf16>
    %cst_19 = arith.constant dense<0.000000e+00> : vector<32x256xf32>
    %38 = tpu.matmul %36, %37, %cst_19 {dimension_numbers = #tpu.dot_dimension_numbers<[1], [0], [0], [1], [0, 0, 1, 1], [], []>} : vector<32x8xbf16>, vector<8x256xbf16>, vector<32x256xf32> -> vector<32x256xf32>
    %39 = vector.shape_cast %38 : vector<32x256xf32> to vector<2x16x256xf32>
    %40 = arith.mulf %39, %16 : vector<2x16x256xf32>
    %cst_20 = arith.constant dense<0.000000e+00> : vector<2x256xf32>
    %41 = vector.multi_reduction <add>, %40, %cst_20 [1] : vector<2x16x256xf32> to vector<2x256xf32>
    %42 = arith.truncf %41 : vector<2x256xf32> to vector<2x256xbf16>
    %c0_21 = arith.constant 0 : index
    %c0_22 = arith.constant 0 : index
    %43 = vector.load %arg6[%c0_21, %c0_22] : memref<256x32xbf16, #tpu.memory_space<vmem>>, vector<256x32xbf16>
    %cst_23 = arith.constant dense<0.000000e+00> : vector<2x32xf32>
    %44 = tpu.matmul %42, %43, %cst_23 {dimension_numbers = #tpu.dot_dimension_numbers<[1], [0], [0], [1], [0, 0, 1, 1], [], []>} : vector<2x256xbf16>, vector<256x32xbf16>, vector<2x32xf32> -> vector<2x32xf32>
    %45 = arith.addf %10, %44 : vector<2x32xf32>
    %c0_24 = arith.constant 0 : index
    %c0_25 = arith.constant 0 : index
    %46 = vector.load %arg7[%c0_24, %c0_25] : memref<1x32xf32, #tpu.memory_space<vmem>>, vector<1x32xf32>
    %47 = vector.broadcast %46 : vector<1x32xf32> to vector<2x32xf32>
    %48 = arith.addf %45, %47 : vector<2x32xf32>
    %cst_26 = arith.constant dense<0.000000e+00> : vector<2x16xf32>
    %49 = vector.multi_reduction <add>, %34, %cst_26 [2] : vector<2x16x8xf32> to vector<2x16xf32>
    %50 = vector.shape_cast %49 : vector<2x16xf32> to vector<2x16x1xf32>
    %cst_27 = arith.constant 1.250000e-01 : f32
    %51 = vector.broadcast %cst_27 : f32 to vector<2x16x1xf32>
    %52 = arith.mulf %50, %51 : vector<2x16x1xf32>
    %53 = arith.extf %0 : vector<2x16x32xbf16> to vector<2x16x32xf32>
    %54 = vector.broadcast %52 : vector<2x16x1xf32> to vector<2x16x32xf32>
    %55 = arith.mulf %53, %54 : vector<2x16x32xf32>
    %56 = arith.truncf %55 : vector<2x16x32xf32> to vector<2x16x32xbf16>
    %c0_28 = arith.constant 0 : index
    %c0_29 = arith.constant 0 : index
    %c0_30 = arith.constant 0 : index
    %57 = vector.load %arg10[%c0_28, %c0_29, %c0_30] : memref<2x16x32xbf16, #tpu.memory_space<vmem>>, vector<2x16x32xbf16>
    tpu.vector_store %arg10[%c0_28, %c0_29, %c0_30], %56 {strides = array<i32>} : memref<2x16x32xbf16, #tpu.memory_space<vmem>>, vector<2x16x32xbf16>,
    %58 = vector.shape_cast %48 : vector<2x32xf32> to vector<2x1x32xf32>
    %c0_31 = arith.constant 0 : index
    %c0_32 = arith.constant 0 : index
    %c0_33 = arith.constant 0 : index
    %59 = vector.load %arg11[%c0_31, %c0_32, %c0_33] : memref<2x1x32xf32, #tpu.memory_space<vmem>>, vector<2x1x32xf32>
    tpu.vector_store %arg11[%c0_31, %c0_32, %c0_33], %58 {strides = array<i32>} : memref<2x1x32xf32, #tpu.memory_space<vmem>>, vector<2x1x32xf32>,
    return
  }
  func.func @transform_0(%arg0: i32) -> (i32, i32, i32) {
    %c0_i32 = arith.constant 0 : i32
    %c0_i32_0 = arith.constant 0 : i32
    %c0_i32_1 = arith.constant 0 : i32
    return %arg0, %c0_i32, %c0_i32_0 : i32, i32, i32
  }
  func.func @transform_1(%arg0: i32) -> (i32, i32, i32) {
    %c0_i32 = arith.constant 0 : i32
    %c0_i32_0 = arith.constant 0 : i32
    %c0_i32_1 = arith.constant 0 : i32
    return %arg0, %c0_i32, %c0_i32_0 : i32, i32, i32
  }
  func.func @transform_2(%arg0: i32) -> (i32, i32) {
    %c0_i32 = arith.constant 0 : i32
    %c0_i32_0 = arith.constant 0 : i32
    %c0_i32_1 = arith.constant 0 : i32
    return %c0_i32, %c0_i32_0 : i32, i32
  }
  func.func @transform_3(%arg0: i32) -> (i32, i32) {
    %c0_i32 = arith.constant 0 : i32
    %c0_i32_0 = arith.constant 0 : i32
    %c0_i32_1 = arith.constant 0 : i32
    return %c0_i32, %c0_i32_0 : i32, i32
  }
  func.func @transform_4(%arg0: i32) -> (i32, i32) {
    %c0_i32 = arith.constant 0 : i32
    %c0_i32_0 = arith.constant 0 : i32
    %c0_i32_1 = arith.constant 0 : i32
    return %c0_i32, %c0_i32_0 : i32, i32
  }
  func.func @transform_5(%arg0: i32) -> (i32, i32) {
    %c0_i32 = arith.constant 0 : i32
    %c0_i32_0 = arith.constant 0 : i32
    %c0_i32_1 = arith.constant 0 : i32
    return %c0_i32, %c0_i32_0 : i32, i32
  }
  func.func @transform_6(%arg0: i32) -> (i32, i32) {
    %c0_i32 = arith.constant 0 : i32
    %c0_i32_0 = arith.constant 0 : i32
    %c0_i32_1 = arith.constant 0 : i32
    return %c0_i32, %c0_i32_0 : i32, i32
  }
  func.func @transform_7(%arg0: i32) -> (i32, i32) {
    %c0_i32 = arith.constant 0 : i32
    %c0_i32_0 = arith.constant 0 : i32
    %c0_i32_1 = arith.constant 0 : i32
    return %c0_i32, %c0_i32_0 : i32, i32
  }
  func.func @transform_8(%arg0: i32) -> (i32, i32) {
    %c0_i32 = arith.constant 0 : i32
    %c0_i32_0 = arith.constant 0 : i32
    %c0_i32_1 = arith.constant 0 : i32
    return %c0_i32, %c0_i32_0 : i32, i32
  }
  func.func @transform_9(%arg0: i32) -> (i32, i32, i32) {
    %c0_i32 = arith.constant 0 : i32
    %c0_i32_0 = arith.constant 0 : i32
    %c0_i32_1 = arith.constant 0 : i32
    return %arg0, %c0_i32, %c0_i32_0 : i32, i32, i32
  }
  func.func @transform_10(%arg0: i32) -> (i32, i32, i32) {
    %c0_i32 = arith.constant 0 : i32
    %c0_i32_0 = arith.constant 0 : i32
    %c0_i32_1 = arith.constant 0 : i32
    return %arg0, %c0_i32, %c0_i32_0 : i32, i32, i32
  }
}

</mosaic_0001>

<llo_original>
// kernel: qsca_forward.1
$region0: #{qsca_forward.1}
  #allocation0 [shape = 'u32[]', space=smem, size = 0x4, offset = 0x4, fixed_abs, tag = 'smem constant byte address 0x4 - core index']
  #allocation1 [shape = 'u32[144,128]{1,0:T(1,128)}', space=vmem, size = 0x12000, scoped, tag = 'internal scratch']
  %s0 = inlined_call_operand.vmem [shape: bf16[2,16,32], index: 0, kind: input, shape index: {}]
  %s1 = inlined_call_operand.vmem [shape: bf16[2,1,32], index: 1, kind: input, shape index: {}]
  %s2 = inlined_call_operand.vmem [shape: bf16[32,288], index: 2, kind: input, shape index: {}]
  %s3 = inlined_call_operand.vmem [shape: f32[1,288], index: 3, kind: input, shape index: {}]
  %s4 = inlined_call_operand.vmem [shape: bf16[32,512], index: 4, kind: input, shape index: {}]
  %s5 = inlined_call_operand.vmem [shape: bf16[256,32], index: 5, kind: input, shape index: {}]
  %s6 = inlined_call_operand.vmem [shape: f32[1,32], index: 6, kind: input, shape index: {}]
  %s7 = inlined_call_operand.vmem [shape: bf16[256,8], index: 7, kind: input, shape index: {}]
  %s8 = inlined_call_operand.vmem [shape: bf16[8,256], index: 8, kind: input, shape index: {}]
  %s9 = inlined_call_operand.vmem [shape: bf16[2,16,32], index: 9, kind: output, shape index: {0}]
  %s10 = inlined_call_operand.hbm [shape: f32[2,1,32], index: 10, kind: output, shape index: {1}]
  %11 = xla_tuple %s9, %s10
  %s12 = sld [smem:[#allocation0]]
  $region54: #{qsca_forward.1} parent=0
    _
  %s14 = ssub.s32 1, %s12
  %s15 = scalar_select 0, %s14, %s12
  $region1: #{qsca_forward.1} parent=0
    #allocation2 [shape = 'u8[1024]{0}', space=vmem, size = 0x400, scoped, tag = 'output window, operand 1, single buffered']
    #allocation3 [shape = 's32[1]{0}', space=sflag, size = 0x4, scoped, tag = 'scoped memory for qsca_forward.1']
    %16 = vsyncpa [#allocation3], 0
    // Predicated region
    $region2: #{qsca_forward.1} parent=1 // pred_check
      _
    $region3: #{qsca_forward.1} parent=1 // pred_check_branch
      %18 = sbr.rel (0) target = $region5
    $region4: #{qsca_forward.1} parent=1 // pred_region
      _
    $region5: #{qsca_forward.1} parent=1 // pred_fallthru
      _
    // Predicated region
    $region6: #{qsca_forward.1} parent=1 // pred_check
      _
    $region7: #{qsca_forward.1} parent=1 // pred_check_branch
      %20 = sbr.rel (0) target = $region9
    $region8: #{qsca_forward.1} parent=1 // pred_region
      _
    $region9: #{qsca_forward.1} parent=1 // pred_fallthru
      _
    // Predicated region
    $region10: #{qsca_forward.1} parent=1 // pred_check
      _
    $region11: #{qsca_forward.1} parent=1 // pred_check_branch
      %22 = sbr.rel (0) target = $region13
    $region12: #{qsca_forward.1} parent=1 // pred_region
      _
    $region13: #{qsca_forward.1} parent=1 // pred_fallthru
      _
    // Predicated region
    $region14: #{qsca_forward.1} parent=1 // pred_check
      _
    $region15: #{qsca_forward.1} parent=1 // pred_check_branch
      %24 = sbr.rel (0) target = $region17
    $region16: #{qsca_forward.1} parent=1 // pred_region
      _
    $region17: #{qsca_forward.1} parent=1 // pred_fallthru
      _
    // Predicated region
    $region18: #{qsca_forward.1} parent=1 // pred_check
      _
    $region19: #{qsca_forward.1} parent=1 // pred_check_branch
      %26 = sbr.rel (0) target = $region21
    $region20: #{qsca_forward.1} parent=1 // pred_region
      _
    $region21: #{qsca_forward.1} parent=1 // pred_fallthru
      _
    // Predicated region
    $region22: #{qsca_forward.1} parent=1 // pred_check
      _
    $region23: #{qsca_forward.1} parent=1 // pred_check_branch
      %28 = sbr.rel (0) target = $region25
    $region24: #{qsca_forward.1} parent=1 // pred_region
      _
    $region25: #{qsca_forward.1} parent=1 // pred_fallthru
      _
    // Predicated region
    $region26: #{qsca_forward.1} parent=1 // pred_check
      _
    $region27: #{qsca_forward.1} parent=1 // pred_check_branch
      %30 = sbr.rel (0) target = $region29
    $region28: #{qsca_forward.1} parent=1 // pred_region
      _
    $region29: #{qsca_forward.1} parent=1 // pred_fallthru
      _
    // Predicated region
    $region30: #{qsca_forward.1} parent=1 // pred_check
      _
    $region31: #{qsca_forward.1} parent=1 // pred_check_branch
      %32 = sbr.rel (0) target = $region33
    $region32: #{qsca_forward.1} parent=1 // pred_region
      _
    $region33: #{qsca_forward.1} parent=1 // pred_fallthru
      _
    // Predicated region
    $region34: #{qsca_forward.1} parent=1 // pred_check
      _
    $region35: #{qsca_forward.1} parent=1 // pred_check_branch
      %34 = sbr.rel (0) target = $region37
    $region36: #{qsca_forward.1} parent=1 // pred_region
      _
    $region37: #{qsca_forward.1} parent=1 // pred_fallthru
      _
    %v36 = vld [vmem:[%s0] sm:$0xf]
    %v37 = vld [vmem:[%s0 + $0x4] sm:$0xf]
    %v38 = vld [vmem:[%s0 + $0x8] sm:$0xf]
    %v39 = vld [vmem:[%s0 + $0xc] sm:$0xf]
    %v40 = vld [vmem:[%s1] sm:$0x1]
    %v41 = vld [vmem:[%s1 + $0x1] sm:$0x1]
    %v42 = vld [vmem:[%s2] sm:$0xff]
    %v43 = vld [vmem:[%s2 + $0x8] sm:$0xf]
    %v44 = vld [vmem:[%s2 + $0xc] sm:$0xff]
    %v45 = vld [vmem:[%s2 + $0x14] sm:$0xf]
    %v46 = vld [vmem:[%s2 + $0x18] sm:$0xff]
    %v47 = vld [vmem:[%s2 + $0x20] sm:$0xf]
    %v48 = vld [vmem:[%s2 + $0x24] sm:$0xff]
    %v49 = vld [vmem:[%s2 + $0x2c] sm:$0xf]
    %v50 = vld [vmem:[%s3] sm:$0x7]
    %v52 = vlaneseq
    %v53 = vshrl.u32 %v52, 7
    %v54 = vsub.s32 0, %v53
    %v55 = vrot.slane %v50, %v54
    %v56 = vlaneseq
    %v57 = vshrl.u32 %v56, 7
    %v58 = vsub.s32 1, %v57
    %v59 = vrot.slane %v50, %v58
    %v60 = vlaneseq
    %v61 = vshrl.u32 %v60, 7
    %v62 = vsub.s32 2, %v61
    %v63 = vrot.slane %v50, %v62
    %v70 = vunpack.c.l.s4 1966171168
    %v71 = vunpack.c.0.s8 %v70
    %v72 = vlaneseq
    %v73 = vshrl.u32 %v72, 7
    %v74 = vsub.s32 %v71, %v73
    %v75 = vrot.slane %v40, %v74
    %v77 = vunpack.c.l.s4 1966171168
    %v78 = vunpack.c.0.s8 %v77
    %v79 = vlaneseq
    %v80 = vshrl.u32 %v79, 7
    %v81 = vsub.s32 %v78, %v80
    %v82 = vrot.slane %v75, %v81
    %v84 = vunpack.c.l.s4 1966171168
    %v85 = vunpack.c.0.s8 %v84
    %v86 = vlaneseq
    %v87 = vshrl.u32 %v86, 7
    %v88 = vsub.s32 %v85, %v87
    %v89 = vrot.slane %v41, %v88
    %v91 = vunpack.c.l.s4 1966171168
    %v92 = vunpack.c.0.s8 %v91
    %v93 = vlaneseq
    %v94 = vshrl.u32 %v93, 7
    %v95 = vsub.s32 %v92, %v94
    %v96 = vrot.slane %v89, %v95
    %v97 = vunpack.c.l.b16 %v82
    %v98 = vunpack.c.l.b16 %v96
    %v99 = vrot.slane %v98, 7
    %vm100 = vcmask 1041409
    %v101 = vsel %vm100, %v99, %v97
    %v102 = vpack.c.b16 %v101, %v101
    %v111 = vunpack.c.l.b16 %v42
    %v112 = vunpack.c.h.b16 %v42
    %v113 = vunpack.c.l.b16 %v43
    %v114 = vunpack.c.l.b16 %v44
    %v115 = vunpack.c.h.b16 %v44
    %v116 = vunpack.c.l.b16 %v45
    %v117 = vunpack.c.l.b16 %v46
    %v118 = vunpack.c.h.b16 %v46
    %v119 = vunpack.c.l.b16 %v47
    %v120 = vunpack.c.l.b16 %v48
    %v121 = vunpack.c.h.b16 %v48
    %v122 = vunpack.c.l.b16 %v49
    %v123 = vpack.c.b16 %v114, %v111
    %v124 = vpack.c.b16 %v115, %v112
    %v125 = vpack.c.b16 %v116, %v113
    %v126 = vpack.c.b16 %v120, %v117
    %v127 = vpack.c.b16 %v121, %v118
    %v128 = vpack.c.b16 %v122, %v119
    %vm135 = vcmask 261120
    %v137 = vsel %vm135, %v102, 0
    %139 = vmatprep.subr.bf16.mxu0 %v124
    %140 = vmatpush1.bf16.msra.mxu0 %v123
    %141 = vmatprep.subr.bf16.mxu0 %v127
    %142 = vmatpush1.bf16.msra.mxu0 %v126
    %143 = vmatprep.subr.bf16.mxu0 0
    %144 = vmatpush1.bf16.msra.mxu0 0
    %145 = vmatprep.subr.bf16.mxu0 0
    %146 = vmatpush1.bf16.msra.mxu0 0
    %147 = vmatprep.subr.bf16.mxu0 0
    %148 = vmatpush1.bf16.msra.mxu0 0
    %149 = vmatprep.subr.bf16.mxu0 0
    %150 = vmatpush1.bf16.msra.mxu0 0
    %151 = vmatprep.subr.bf16.mxu0 0
    %152 = vmatpush1.bf16.msra.mxu0 0
    %153 = vmatprep.subr.bf16.mxu0 0
    %154 = vmatpush1.bf16.msra.mxu0 0
    %155 = vmatprep.subr.bf16.mxu0 0
    %156 = vmatpush1.bf16.msra.mxu0 0
    %157 = vmatprep.subr.bf16.mxu0 0
    %158 = vmatpush1.bf16.msra.mxu0 0
    %159 = vmatprep.subr.bf16.mxu0 0
    %160 = vmatpush1.bf16.msra.mxu0 0
    %161 = vmatprep.subr.bf16.mxu0 0
    %162 = vmatpush1.bf16.msra.mxu0 0
    %163 = vmatprep.subr.bf16.mxu0 0
    %164 = vmatpush1.bf16.msra.mxu0 0
    %165 = vmatprep.subr.bf16.mxu0 0
    %166 = vmatpush1.bf16.msra.mxu0 0
    %167 = vmatprep.subr.bf16.mxu0 0
    %168 = vmatpush1.bf16.msra.mxu0 0
    %169 = vmatprep.subr.bf16.mxu0 0
    %170 = vmatpush1.bf16.msra.mxu0 0
    %171 = vmatprep.mubr.bf16.mxu0 0
    %172 = vmatmul.mubr.bf16.gmra.mrb[0].mxu0 %v137
    %v173 = vpop.f32.mrb[0].mxu0
    %v174 = vadd.f32 %v55, %v173
    %v175 = vpop.f32.mrb[0].mxu0
    %v176 = vadd.f32 %v59, %v175
    %v177 = vpop.f32.mrb[0].mxu0
    %v178 = vpop.f32.mrb[0].mxu0
    %179 = vdwg.mxu0
    %180 = vmatprep.subr.bf16.mxu0 0
    %181 = vmatpush1.bf16.msra.mxu0 %v125
    %182 = vmatprep.subr.bf16.mxu0 0
    %183 = vmatpush1.bf16.msra.mxu0 %v128
    %184 = vmatprep.subr.bf16.mxu0 0
    %185 = vmatpush1.bf16.msra.mxu0 0
    %186 = vmatprep.subr.bf16.mxu0 0
    %187 = vmatpush1.bf16.msra.mxu0 0
    %188 = vmatprep.subr.bf16.mxu0 0
    %189 = vmatpush1.bf16.msra.mxu0 0
    %190 = vmatprep.subr.bf16.mxu0 0
    %191 = vmatpush1.bf16.msra.mxu0 0
    %192 = vmatprep.subr.bf16.mxu0 0
    %193 = vmatpush1.bf16.msra.mxu0 0
    %194 = vmatprep.subr.bf16.mxu0 0
    %195 = vmatpush1.bf16.msra.mxu0 0
    %196 = vmatprep.subr.bf16.mxu0 0
    %197 = vmatpush1.bf16.msra.mxu0 0
    %198 = vmatprep.subr.bf16.mxu0 0
    %199 = vmatpush1.bf16.msra.mxu0 0
    %200 = vmatprep.subr.bf16.mxu0 0
    %201 = vmatpush1.bf16.msra.mxu0 0
    %202 = vmatprep.subr.bf16.mxu0 0
    %203 = vmatpush1.bf16.msra.mxu0 0
    %204 = vmatprep.subr.bf16.mxu0 0
    %205 = vmatpush1.bf16.msra.mxu0 0
    %206 = vmatprep.subr.bf16.mxu0 0
    %207 = vmatpush1.bf16.msra.mxu0 0
    %208 = vmatprep.subr.bf16.mxu0 0
    %209 = vmatpush1.bf16.msra.mxu0 0
    %210 = vmatprep.subr.bf16.mxu0 0
    %211 = vmatpush1.bf16.msra.mxu0 0
    %212 = vmatprep.mubr.bf16.mxu0 0
    %213 = vmatmul.mubr.bf16.gmra.mrb[0].mxu0 %v137
    %v214 = vpop.f32.mrb[0].mxu0
    %v215 = vadd.f32 %v63, %v214
    %v216 = vpop.f32.mrb[0].mxu0
    %v217 = vpop.f32.mrb[0].mxu0
    %v218 = vpop.f32.mrb[0].mxu0
    %219 = vdwg.mxu0
    %v220 = vld [vmem:[%s4] sm:$0xff]
    %v221 = vld [vmem:[%s4 + $0x8] sm:$0xff]
    %v222 = vld [vmem:[%s4 + $0x10] sm:$0xff]
    %v223 = vld [vmem:[%s4 + $0x18] sm:$0xff]
    %v224 = vld [vmem:[%s4 + $0x20] sm:$0xff]
    %v225 = vld [vmem:[%s4 + $0x28] sm:$0xff]
    %v226 = vld [vmem:[%s4 + $0x30] sm:$0xff]
    %v227 = vld [vmem:[%s4 + $0x38] sm:$0xff]
    %v232 = vunpack.c.l.b16 %v36
    %v233 = vunpack.c.l.b16 %v37
    %v234 = vunpack.c.l.b16 %v38
    %v235 = vunpack.c.l.b16 %v39
    %v236 = vpack.c.b16 %v233, %v232
    %v237 = vpack.c.b16 %v235, %v234
    %v246 = vunpack.c.l.b16 %v220
    %v247 = vunpack.c.h.b16 %v220
    %v248 = vunpack.c.l.b16 %v221
    %v249 = vunpack.c.h.b16 %v221
    %v250 = vunpack.c.l.b16 %v222
    %v251 = vunpack.c.h.b16 %v222
    %v252 = vunpack.c.l.b16 %v223
    %v253 = vunpack.c.h.b16 %v223
    %v254 = vunpack.c.l.b16 %v224
    %v255 = vunpack.c.h.b16 %v224
    %v256 = vunpack.c.l.b16 %v225
    %v257 = vunpack.c.h.b16 %v225
    %v258 = vunpack.c.l.b16 %v226
    %v259 = vunpack.c.h.b16 %v226
    %v260 = vunpack.c.l.b16 %v227
    %v261 = vunpack.c.h.b16 %v227
    %v262 = vpack.c.b16 %v250, %v246
    %v263 = vpack.c.b16 %v251, %v247
    %v264 = vpack.c.b16 %v252, %v248
    %v265 = vpack.c.b16 %v253, %v249
    %v266 = vpack.c.b16 %v258, %v254
    %v267 = vpack.c.b16 %v259, %v255
    %v268 = vpack.c.b16 %v260, %v256
    %v269 = vpack.c.b16 %v261, %v257
    %v279 = vsel %vm135, %v236, 0
    %v282 = vsel %vm135, %v237, 0
    %284 = vmatprep.subr.bf16.mxu0 %v263
    %285 = vmatpush1.bf16.msra.mxu0 %v262
    %286 = vmatprep.subr.bf16.mxu0 %v267
    %287 = vmatpush1.bf16.msra.mxu0 %v266
    %288 = vmatprep.subr.bf16.mxu0 0
    %289 = vmatpush1.bf16.msra.mxu0 0
    %290 = vmatprep.subr.bf16.mxu0 0
    %291 = vmatpush1.bf16.msra.mxu0 0
    %292 = vmatprep.subr.bf16.mxu0 0
    %293 = vmatpush1.bf16.msra.mxu0 0
    %294 = vmatprep.subr.bf16.mxu0 0
    %295 = vmatpush1.bf16.msra.mxu0 0
    %296 = vmatprep.subr.bf16.mxu0 0
    %297 = vmatpush1.bf16.msra.mxu0 0
    %298 = vmatprep.subr.bf16.mxu0 0
    %299 = vmatpush1.bf16.msra.mxu0 0
    %300 = vmatprep.subr.bf16.mxu0 0
    %301 = vmatpush1.bf16.msra.mxu0 0
    %302 = vmatprep.subr.bf16.mxu0 0
    %303 = vmatpush1.bf16.msra.mxu0 0
    %304 = vmatprep.subr.bf16.mxu0 0
    %305 = vmatpush1.bf16.msra.mxu0 0
    %306 = vmatprep.subr.bf16.mxu0 0
    %307 = vmatpush1.bf16.msra.mxu0 0
    %308 = vmatprep.subr.bf16.mxu0 0
    %309 = vmatpush1.bf16.msra.mxu0 0
    %310 = vmatprep.subr.bf16.mxu0 0
    %311 = vmatpush1.bf16.msra.mxu0 0
    %312 = vmatprep.subr.bf16.mxu0 0
    %313 = vmatpush1.bf16.msra.mxu0 0
    %314 = vmatprep.subr.bf16.mxu0 0
    %315 = vmatpush1.bf16.msra.mxu0 0
    %316 = vmatprep.mubr.bf16.mxu0 0
    %317 = vmatmul.mubr.bf16.gmra.mrb[0].mxu0 %v279
    %v318 = vpop.f32.mrb[0].mxu0
    %v319 = vadd.f32 0.0, %v318
    %v320 = vpop.f32.mrb[0].mxu0
    %v321 = vadd.f32 0.0, %v320
    %v322 = vpop.f32.mrb[0].mxu0
    %v323 = vadd.f32 0.0, %v322
    %v324 = vpop.f32.mrb[0].mxu0
    %v325 = vadd.f32 0.0, %v324
    %326 = vmatprep.mubr.bf16.mxu0 0
    %327 = vmatmul.mubr.bf16.gmra.mrb[0].mxu0 %v282
    %v328 = vpop.f32.mrb[0].mxu0
    %v329 = vadd.f32 0.0, %v328
    %v330 = vpop.f32.mrb[0].mxu0
    %v331 = vadd.f32 0.0, %v330
    %v332 = vpop.f32.mrb[0].mxu0
    %v333 = vadd.f32 0.0, %v332
    %v334 = vpop.f32.mrb[0].mxu0
    %v335 = vadd.f32 0.0, %v334
    %336 = vdwg.mxu0
    %337 = vmatprep.subr.bf16.mxu0 %v265
    %338 = vmatpush1.bf16.msra.mxu0 %v264
    %339 = vmatprep.subr.bf16.mxu0 %v269
    %340 = vmatpush1.bf16.msra.mxu0 %v268
    %341 = vmatprep.subr.bf16.mxu0 0
    %342 = vmatpush1.bf16.msra.mxu0 0
    %343 = vmatprep.subr.bf16.mxu0 0
    %344 = vmatpush1.bf16.msra.mxu0 0
    %345 = vmatprep.subr.bf16.mxu0 0
    %346 = vmatpush1.bf16.msra.mxu0 0
    %347 = vmatprep.subr.bf16.mxu0 0
    %348 = vmatpush1.bf16.msra.mxu0 0
    %349 = vmatprep.subr.bf16.mxu0 0
    %350 = vmatpush1.bf16.msra.mxu0 0
    %351 = vmatprep.subr.bf16.mxu0 0
    %352 = vmatpush1.bf16.msra.mxu0 0
    %353 = vmatprep.subr.bf16.mxu0 0
    %354 = vmatpush1.bf16.msra.mxu0 0
    %355 = vmatprep.subr.bf16.mxu0 0
    %356 = vmatpush1.bf16.msra.mxu0 0
    %357 = vmatprep.subr.bf16.mxu0 0
    %358 = vmatpush1.bf16.msra.mxu0 0
    %359 = vmatprep.subr.bf16.mxu0 0
    %360 = vmatpush1.bf16.msra.mxu0 0
    %361 = vmatprep.subr.bf16.mxu0 0
    %362 = vmatpush1.bf16.msra.mxu0 0
    %363 = vmatprep.subr.bf16.mxu0 0
    %364 = vmatpush1.bf16.msra.mxu0 0
    %365 = vmatprep.subr.bf16.mxu0 0
    %366 = vmatpush1.bf16.msra.mxu0 0
    %367 = vmatprep.subr.bf16.mxu0 0
    %368 = vmatpush1.bf16.msra.mxu0 0
    %369 = vmatprep.mubr.bf16.mxu0 0
    %370 = vmatmul.mubr.bf16.gmra.mrb[0].mxu0 %v279
    %v371 = vpop.f32.mrb[0].mxu0
    %v372 = vadd.f32 0.0, %v371
    %v373 = vpop.f32.mrb[0].mxu0
    %v374 = vadd.f32 0.0, %v373
    %v375 = vpop.f32.mrb[0].mxu0
    %v376 = vadd.f32 0.0, %v375
    %v377 = vpop.f32.mrb[0].mxu0
    %v378 = vadd.f32 0.0, %v377
    %379 = vmatprep.mubr.bf16.mxu0 0
    %380 = vmatmul.mubr.bf16.gmra.mrb[0].mxu0 %v282
    %v381 = vpop.f32.mrb[0].mxu0
    %v382 = vadd.f32 0.0, %v381
    %v383 = vpop.f32.mrb[0].mxu0
    %v384 = vadd.f32 0.0, %v383
    %v385 = vpop.f32.mrb[0].mxu0
    %v386 = vadd.f32 0.0, %v385
    %v387 = vpop.f32.mrb[0].mxu0
    %v388 = vadd.f32 0.0, %v387
    %389 = vdwg.mxu0
    %v392 = vcombine.low %v174, %v176
    %v394 = vunpack.c.l.s4 1966171168
    %v395 = vunpack.c.0.s8 %v394
    %v396 = vlaneseq
    %v397 = vshrl.u32 %v396, 7
    %v398 = vsub.s32 %v395, %v397
    %v399 = vrot.slane %v392, %v398
    %v400 = vcombine.high %v399, %v399
    %v402 = vunpack.c.l.s4 1966171168
    %v403 = vunpack.c.0.s8 %v402
    %v404 = vlaneseq
    %v405 = vshrl.u32 %v404, 7
    %v406 = vsub.s32 %v403, %v405
    %v407 = vrot.slane %v399, %v406
    %v409 = vunpack.c.l.s4 1966171168
    %v410 = vunpack.c.0.s8 %v409
    %v411 = vlaneseq
    %v412 = vshrl.u32 %v411, 7
    %v413 = vsub.s32 %v410, %v412
    %v414 = vrot.slane %v400, %v413
    %v415 = vlaneseq
    %v416 = vshrl.u32 %v415, 7
    %v417 = vsub.s32 0, %v416
    %v418 = vrot.slane %v407, %v417
    %v419 = vlaneseq
    %v420 = vshrl.u32 %v419, 7
    %v421 = vsub.s32 1, %v420
    %v422 = vrot.slane %v407, %v421
    %v423 = vlaneseq
    %v424 = vshrl.u32 %v423, 7
    %v425 = vsub.s32 0, %v424
    %v426 = vrot.slane %v414, %v425
    %v427 = vlaneseq
    %v428 = vshrl.u32 %v427, 7
    %v429 = vsub.s32 1, %v428
    %v430 = vrot.slane %v414, %v429
    %v435 = vmul.f32 %v319, %v418
    %v436 = vmul.f32 %v321, %v422
    %v437 = vmul.f32 %v323, %v418
    %v438 = vmul.f32 %v325, %v422
    %v439 = vmul.f32 %v329, %v426
    %v440 = vmul.f32 %v331, %v430
    %v441 = vmul.f32 %v333, %v426
    %v442 = vmul.f32 %v335, %v430
    %v443 = vpack.c.bf16 %v437, %v435
    %v444 = vpack.c.bf16 %v438, %v436
    %v445 = vpack.c.bf16 %v441, %v439
    %v446 = vpack.c.bf16 %v442, %v440
    %v447 = vld [vmem:[%s7] sm:$0xf]
    %v448 = vld [vmem:[%s7 + $0x4] sm:$0xf]
    %v449 = vld [vmem:[%s7 + $0x8] sm:$0xf]
    %v450 = vld [vmem:[%s7 + $0xc] sm:$0xf]
    %v451 = vld [vmem:[%s7 + $0x10] sm:$0xf]
    %v452 = vld [vmem:[%s7 + $0x14] sm:$0xf]
    %v453 = vld [vmem:[%s7 + $0x18] sm:$0xf]
    %v454 = vld [vmem:[%s7 + $0x1c] sm:$0xf]
    %v455 = vld [vmem:[%s7 + $0x20] sm:$0xf]
    %v456 = vld [vmem:[%s7 + $0x24] sm:$0xf]
    %v457 = vld [vmem:[%s7 + $0x28] sm:$0xf]
    %v458 = vld [vmem:[%s7 + $0x2c] sm:$0xf]
    %v459 = vld [vmem:[%s7 + $0x30] sm:$0xf]
    %v460 = vld [vmem:[%s7 + $0x34] sm:$0xf]
    %v461 = vld [vmem:[%s7 + $0x38] sm:$0xf]
    %v462 = vld [vmem:[%s7 + $0x3c] sm:$0xf]
    %v463 = vld [vmem:[%s7 + $0x40] sm:$0xf]
    %v464 = vld [vmem:[%s7 + $0x44] sm:$0xf]
    %v465 = vld [vmem:[%s7 + $0x48] sm:$0xf]
    %v466 = vld [vmem:[%s7 + $0x4c] sm:$0xf]
    %v467 = vld [vmem:[%s7 + $0x50] sm:$0xf]
    %v468 = vld [vmem:[%s7 + $0x54] sm:$0xf]
    %v469 = vld [vmem:[%s7 + $0x58] sm:$0xf]
    %v470 = vld [vmem:[%s7 + $0x5c] sm:$0xf]
    %v471 = vld [vmem:[%s7 + $0x60] sm:$0xf]
    %v472 = vld [vmem:[%s7 + $0x64] sm:$0xf]
    %v473 = vld [vmem:[%s7 + $0x68] sm:$0xf]
    %v474 = vld [vmem:[%s7 + $0x6c] sm:$0xf]
    %v475 = vld [vmem:[%s7 + $0x70] sm:$0xf]
    %v476 = vld [vmem:[%s7 + $0x74] sm:$0xf]
    %v477 = vld [vmem:[%s7 + $0x78] sm:$0xf]
    %v478 = vld [vmem:[%s7 + $0x7c] sm:$0xf]
    %v511 = vunpack.c.l.b16 %v447
    %v512 = vunpack.c.l.b16 %v448
    %v513 = vunpack.c.l.b16 %v449
    %v514 = vunpack.c.l.b16 %v450
    %v515 = vunpack.c.l.b16 %v451
    %v516 = vunpack.c.l.b16 %v452
    %v517 = vunpack.c.l.b16 %v453
    %v518 = vunpack.c.l.b16 %v454
    %v519 = vunpack.c.l.b16 %v455
    %v520 = vunpack.c.l.b16 %v456
    %v521 = vunpack.c.l.b16 %v457
    %v522 = vunpack.c.l.b16 %v458
    %v523 = vunpack.c.l.b16 %v459
    %v524 = vunpack.c.l.b16 %v460
    %v525 = vunpack.c.l.b16 %v461
    %v526 = vunpack.c.l.b16 %v462
    %v527 = vunpack.c.l.b16 %v463
    %v528 = vunpack.c.l.b16 %v464
    %v529 = vunpack.c.l.b16 %v465
    %v530 = vunpack.c.l.b16 %v466
    %v531 = vunpack.c.l.b16 %v467
    %v532 = vunpack.c.l.b16 %v468
    %v533 = vunpack.c.l.b16 %v469
    %v534 = vunpack.c.l.b16 %v470
    %v535 = vunpack.c.l.b16 %v471
    %v536 = vunpack.c.l.b16 %v472
    %v537 = vunpack.c.l.b16 %v473
    %v538 = vunpack.c.l.b16 %v474
    %v539 = vunpack.c.l.b16 %v475
    %v540 = vunpack.c.l.b16 %v476
    %v541 = vunpack.c.l.b16 %v477
    %v542 = vunpack.c.l.b16 %v478
    %v543 = vpack.c.b16 %v512, %v511
    %v544 = vpack.c.b16 %v514, %v513
    %v545 = vpack.c.b16 %v516, %v515
    %v546 = vpack.c.b16 %v518, %v517
    %v547 = vpack.c.b16 %v520, %v519
    %v548 = vpack.c.b16 %v522, %v521
    %v549 = vpack.c.b16 %v524, %v523
    %v550 = vpack.c.b16 %v526, %v525
    %v551 = vpack.c.b16 %v528, %v527
    %v552 = vpack.c.b16 %v530, %v529
    %v553 = vpack.c.b16 %v532, %v531
    %v554 = vpack.c.b16 %v534, %v533
    %v555 = vpack.c.b16 %v536, %v535
    %v556 = vpack.c.b16 %v538, %v537
    %v557 = vpack.c.b16 %v540, %v539
    %v558 = vpack.c.b16 %v542, %v541
    %575 = vmatprep.subr.bf16.mxu0 0
    %576 = vmatpush1.bf16.msra.mxu0 %v543
    %577 = vmatprep.subr.bf16.mxu0 0
    %578 = vmatpush1.bf16.msra.mxu0 %v544
    %579 = vmatprep.subr.bf16.mxu0 0
    %580 = vmatpush1.bf16.msra.mxu0 %v545
    %581 = vmatprep.subr.bf16.mxu0 0
    %582 = vmatpush1.bf16.msra.mxu0 %v546
    %583 = vmatprep.subr.bf16.mxu0 0
    %584 = vmatpush1.bf16.msra.mxu0 %v547
    %585 = vmatprep.subr.bf16.mxu0 0
    %586 = vmatpush1.bf16.msra.mxu0 %v548
    %587 = vmatprep.subr.bf16.mxu0 0
    %588 = vmatpush1.bf16.msra.mxu0 %v549
    %589 = vmatprep.subr.bf16.mxu0 0
    %590 = vmatpush1.bf16.msra.mxu0 %v550
    %591 = vmatprep.subr.bf16.mxu0 0
    %592 = vmatpush1.bf16.msra.mxu0 %v551
    %593 = vmatprep.subr.bf16.mxu0 0
    %594 = vmatpush1.bf16.msra.mxu0 %v552
    %595 = vmatprep.subr.bf16.mxu0 0
    %596 = vmatpush1.bf16.msra.mxu0 %v553
    %597 = vmatprep.subr.bf16.mxu0 0
    %598 = vmatpush1.bf16.msra.mxu0 %v554
    %599 = vmatprep.subr.bf16.mxu0 0
    %600 = vmatpush1.bf16.msra.mxu0 %v555
    %601 = vmatprep.subr.bf16.mxu0 0
    %602 = vmatpush1.bf16.msra.mxu0 %v556
    %603 = vmatprep.subr.bf16.mxu0 0
    %604 = vmatpush1.bf16.msra.mxu0 %v557
    %605 = vmatprep.subr.bf16.mxu0 0
    %606 = vmatpush1.bf16.msra.mxu0 %v558
    %607 = vmatprep.mubr.bf16.mxu0 %v444
    %608 = vmatmul.mubr.bf16.gmra.mrb[0].mxu0 %v443
    %v609 = vpop.f32.mrb[0].mxu0
    %v610 = vadd.f32 0.0, %v609
    %v611 = vpop.f32.mrb[0].mxu0
    %v612 = vpop.f32.mrb[0].mxu0
    %v613 = vadd.f32 0.0, %v612
    %v614 = vpop.f32.mrb[0].mxu0
    %615 = vmatprep.mubr.bf16.mxu0 %v446
    %616 = vmatmul.mubr.bf16.gmra.mrb[0].mxu0 %v445
    %v617 = vpop.f32.mrb[0].mxu0
    %v618 = vadd.f32 0.0, %v617
    %v619 = vpop.f32.mrb[0].mxu0
    %v620 = vpop.f32.mrb[0].mxu0
    %v621 = vadd.f32 0.0, %v620
    %v622 = vpop.f32.mrb[0].mxu0
    %623 = vdwg.mxu0
    %vm624 = vcmask 64512
    %v625 = vsel %vm624, %v610, -inf
    %v626 = vsel %vm624, %v613, -inf
    %v627 = vmax.f32 %v625, %v626
    %v628 = vrot.slane %v627, 4
    %v629 = vmax.f32 %v627, %v628
    %v630 = vrot.slane %v629, 2
    %v631 = vmax.f32 %v629, %v630
    %v632 = vrot.slane %v631, 1
    %v633 = vmax.f32 %v631, %v632
    %v634 = vsel %vm624, %v618, -inf
    %v635 = vsel %vm624, %v621, -inf
    %v636 = vmax.f32 %v634, %v635
    %v637 = vrot.slane %v636, 4
    %v638 = vmax.f32 %v636, %v637
    %v639 = vrot.slane %v638, 2
    %v640 = vmax.f32 %v638, %v639
    %v641 = vrot.slane %v640, 1
    %v642 = vmax.f32 %v640, %v641
    %v643 = vsub.f32 %v610, %v633
    %v644 = vsub.f32 %v613, %v633
    %v645 = vsub.f32 %v618, %v642
    %v646 = vsub.f32 %v621, %v642
    %v647 = vmul.f32 %v643, 1.442695
    %v648 = vpow.pop %v647
    %v649 = vmul.f32 %v644, 1.442695
    %v650 = vpow.pop %v649
    %v651 = vmul.f32 %v645, 1.442695
    %v652 = vpow.pop %v651
    %v653 = vmul.f32 %v646, 1.442695
    %v654 = vpow.pop %v653
    %v655 = vsel %vm624, %v648, 0.0
    %v656 = vsel %vm624, %v650, 0.0
    %v657 = vadd.f32 %v655, %v656
    %v658 = vrot.slane %v657, 4
    %v659 = vadd.f32 %v657, %v658
    %v660 = vrot.slane %v659, 2
    %v661 = vadd.f32 %v659, %v660
    %v662 = vrot.slane %v661, 1
    %v663 = vadd.f32 %v661, %v662
    %v664 = vsel %vm624, %v652, 0.0
    %v665 = vsel %vm624, %v654, 0.0
    %v666 = vadd.f32 %v664, %v665
    %v667 = vrot.slane %v666, 4
    %v668 = vadd.f32 %v666, %v667
    %v669 = vrot.slane %v668, 2
    %v670 = vadd.f32 %v668, %v669
    %v671 = vrot.slane %v670, 1
    %v672 = vadd.f32 %v670, %v671
    %v673 = vrcp.pop %v663
    %v674 = vrcp.pop %v672
    %v675 = vmul.f32 %v648, %v673
    %v676 = vmul.f32 %v650, %v673
    %v677 = vmul.f32 %v652, %v674
    %v678 = vmul.f32 %v654, %v674
    %v679 = vpack.c.bf16 %v676, %v675
    %v680 = vpack.c.bf16 %v678, %v677
    %v681 = vld [vmem:[%s8] sm:$0xff]
    %v683 = vunpack.c.l.b16 %v681
    %v684 = vunpack.c.h.b16 %v681
    %v685 = vpack.c.b16 %v683, %v683
    %v686 = vpack.c.b16 %v684, %v684
    %v688 = vsel %vm624, %v679, 0
    %v691 = vsel %vm624, %v680, 0
    %vm693 = vcmask 1043456
    %v695 = vsel %vm693, %v685, 0
    %v698 = vsel %vm693, %v686, 0
    %700 = vmatprep.subr.bf16.mxu0 %v698
    %701 = vmatpush1.bf16.msra.mxu0 %v695
    %702 = vmatprep.subr.bf16.mxu0 0
    %703 = vmatpush1.bf16.msra.mxu0 0
    %704 = vmatprep.subr.bf16.mxu0 0
    %705 = vmatpush1.bf16.msra.mxu0 0
    %706 = vmatprep.subr.bf16.mxu0 0
    %707 = vmatpush1.bf16.msra.mxu0 0
    %708 = vmatprep.subr.bf16.mxu0 0
    %709 = vmatpush1.bf16.msra.mxu0 0
    %710 = vmatprep.subr.bf16.mxu0 0
    %711 = vmatpush1.bf16.msra.mxu0 0
    %712 = vmatprep.subr.bf16.mxu0 0
    %713 = vmatpush1.bf16.msra.mxu0 0
    %714 = vmatprep.subr.bf16.mxu0 0
    %715 = vmatpush1.bf16.msra.mxu0 0
    %716 = vmatprep.subr.bf16.mxu0 0
    %717 = vmatpush1.bf16.msra.mxu0 0
    %718 = vmatprep.subr.bf16.mxu0 0
    %719 = vmatpush1.bf16.msra.mxu0 0
    %720 = vmatprep.subr.bf16.mxu0 0
    %721 = vmatpush1.bf16.msra.mxu0 0
    %722 = vmatprep.subr.bf16.mxu0 0
    %723 = vmatpush1.bf16.msra.mxu0 0
    %724 = vmatprep.subr.bf16.mxu0 0
    %725 = vmatpush1.bf16.msra.mxu0 0
    %726 = vmatprep.subr.bf16.mxu0 0
    %727 = vmatpush1.bf16.msra.mxu0 0
    %728 = vmatprep.subr.bf16.mxu0 0
    %729 = vmatpush1.bf16.msra.mxu0 0
    %730 = vmatprep.subr.bf16.mxu0 0
    %731 = vmatpush1.bf16.msra.mxu0 0
    %732 = vmatprep.mubr.bf16.mxu0 0
    %733 = vmatmul.mubr.bf16.gmra.mrb[0].mxu0 %v688
    %v734 = vpop.f32.mrb[0].mxu0
    %v735 = vadd.f32 0.0, %v734
    %v736 = vpop.f32.mrb[0].mxu0
    %v737 = vadd.f32 0.0, %v736
    %v738 = vpop.f32.mrb[0].mxu0
    %v739 = vadd.f32 0.0, %v738
    %v740 = vpop.f32.mrb[0].mxu0
    %v741 = vadd.f32 0.0, %v740
    %742 = vmatprep.mubr.bf16.mxu0 0
    %743 = vmatmul.mubr.bf16.gmra.mrb[0].mxu0 %v691
    %v744 = vpop.f32.mrb[0].mxu0
    %v745 = vadd.f32 0.0, %v744
    %v746 = vpop.f32.mrb[0].mxu0
    %v747 = vadd.f32 0.0, %v746
    %v748 = vpop.f32.mrb[0].mxu0
    %v749 = vadd.f32 0.0, %v748
    %v750 = vpop.f32.mrb[0].mxu0
    %v751 = vadd.f32 0.0, %v750
    %752 = vdwg.mxu0
    %v753 = vmul.f32 %v735, %v372
    %v754 = vmul.f32 %v737, %v374
    %v755 = vmul.f32 %v739, %v376
    %v756 = vmul.f32 %v741, %v378
    %v757 = vmul.f32 %v745, %v382
    %v758 = vmul.f32 %v747, %v384
    %v759 = vmul.f32 %v749, %v386
    %v760 = vmul.f32 %v751, %v388
    %v761 = vadd.f32 %v753, %v755
    %v762 = vrot.slane %v761, 4
    %v763 = vadd.f32 %v761, %v762
    %v764 = vrot.slane %v763, 2
    %v765 = vadd.f32 %v763, %v764
    %v766 = vrot.slane %v765, 1
    %v767 = vadd.f32 %v765, %v766
    %v768 = vadd.f32 %v754, %v756
    %v769 = vrot.slane %v768, 4
    %v770 = vadd.f32 %v768, %v769
    %v771 = vrot.slane %v770, 2
    %v772 = vadd.f32 %v770, %v771
    %v773 = vrot.slane %v772, 1
    %v774 = vadd.f32 %v772, %v773
    %v775 = vadd.f32 %v757, %v759
    %v776 = vrot.slane %v775, 4
    %v777 = vadd.f32 %v775, %v776
    %v778 = vrot.slane %v777, 2
    %v779 = vadd.f32 %v777, %v778
    %v780 = vrot.slane %v779, 1
    %v781 = vadd.f32 %v779, %v780
    %v782 = vadd.f32 %v758, %v760
    %v783 = vrot.slane %v782, 4
    %v784 = vadd.f32 %v782, %v783
    %v785 = vrot.slane %v784, 2
    %v786 = vadd.f32 %v784, %v785
    %v787 = vrot.slane %v786, 1
    %v788 = vadd.f32 %v786, %v787
    %v789 = vpack.c.bf16 %v767, %v767
    %v790 = vpack.c.bf16 %v774, %v774
    %v791 = vpack.c.bf16 %v781, %v781
    %v792 = vpack.c.bf16 %v788, %v788
    %v793 = vld [vmem:[%s5] sm:$0xf]
    %v794 = vld [vmem:[%s5 + $0x4] sm:$0xf]
    %v795 = vld [vmem:[%s5 + $0x8] sm:$0xf]
    %v796 = vld [vmem:[%s5 + $0xc] sm:$0xf]
    %v797 = vld [vmem:[%s5 + $0x10] sm:$0xf]
    %v798 = vld [vmem:[%s5 + $0x14] sm:$0xf]
    %v799 = vld [vmem:[%s5 + $0x18] sm:$0xf]
    %v800 = vld [vmem:[%s5 + $0x1c] sm:$0xf]
    %v801 = vld [vmem:[%s5 + $0x20] sm:$0xf]
    %v802 = vld [vmem:[%s5 + $0x24] sm:$0xf]
    %v803 = vld [vmem:[%s5 + $0x28] sm:$0xf]
    %v804 = vld [vmem:[%s5 + $0x2c] sm:$0xf]
    %v805 = vld [vmem:[%s5 + $0x30] sm:$0xf]
    %v806 = vld [vmem:[%s5 + $0x34] sm:$0xf]
    %v807 = vld [vmem:[%s5 + $0x38] sm:$0xf]
    %v808 = vld [vmem:[%s5 + $0x3c] sm:$0xf]
    %v809 = vld [vmem:[%s5 + $0x40] sm:$0xf]
    %v810 = vld [vmem:[%s5 + $0x44] sm:$0xf]
    %v811 = vld [vmem:[%s5 + $0x48] sm:$0xf]
    %v812 = vld [vmem:[%s5 + $0x4c] sm:$0xf]
    %v813 = vld [vmem:[%s5 + $0x50] sm:$0xf]
    %v814 = vld [vmem:[%s5 + $0x54] sm:$0xf]
    %v815 = vld [vmem:[%s5 + $0x58] sm:$0xf]
    %v816 = vld [vmem:[%s5 + $0x5c] sm:$0xf]
    %v817 = vld [vmem:[%s5 + $0x60] sm:$0xf]
    %v818 = vld [vmem:[%s5 + $0x64] sm:$0xf]
    %v819 = vld [vmem:[%s5 + $0x68] sm:$0xf]
    %v820 = vld [vmem:[%s5 + $0x6c] sm:$0xf]
    %v821 = vld [vmem:[%s5 + $0x70] sm:$0xf]
    %v822 = vld [vmem:[%s5 + $0x74] sm:$0xf]
    %v823 = vld [vmem:[%s5 + $0x78] sm:$0xf]
    %v824 = vld [vmem:[%s5 + $0x7c] sm:$0xf]
    %v829 = vunpack.c.l.b16 %v789
    %v830 = vunpack.c.l.b16 %v790
    %v831 = vunpack.c.l.b16 %v791
    %v832 = vunpack.c.l.b16 %v792
    %v833 = vsel %vm100, %v831, %v829
    %v834 = vsel %vm100, %v832, %v830
    %v835 = vpack.c.b16 %v833, %v833
    %v836 = vpack.c.b16 %v834, %v834
    %v871 = vunpack.c.l.b16 %v793
    %v872 = vunpack.c.l.b16 %v794
    %v873 = vunpack.c.l.b16 %v795
    %v874 = vunpack.c.l.b16 %v796
    %v875 = vunpack.c.l.b16 %v797
    %v876 = vunpack.c.l.b16 %v798
    %v877 = vunpack.c.l.b16 %v799
    %v878 = vunpack.c.l.b16 %v800
    %v879 = vunpack.c.l.b16 %v801
    %v880 = vunpack.c.l.b16 %v802
    %v881 = vunpack.c.l.b16 %v803
    %v882 = vunpack.c.l.b16 %v804
    %v883 = vunpack.c.l.b16 %v805
    %v884 = vunpack.c.l.b16 %v806
    %v885 = vunpack.c.l.b16 %v807
    %v886 = vunpack.c.l.b16 %v808
    %v887 = vunpack.c.l.b16 %v809
    %v888 = vunpack.c.l.b16 %v810
    %v889 = vunpack.c.l.b16 %v811
    %v890 = vunpack.c.l.b16 %v812
    %v891 = vunpack.c.l.b16 %v813
    %v892 = vunpack.c.l.b16 %v814
    %v893 = vunpack.c.l.b16 %v815
    %v894 = vunpack.c.l.b16 %v816
    %v895 = vunpack.c.l.b16 %v817
    %v896 = vunpack.c.l.b16 %v818
    %v897 = vunpack.c.l.b16 %v819
    %v898 = vunpack.c.l.b16 %v820
    %v899 = vunpack.c.l.b16 %v821
    %v900 = vunpack.c.l.b16 %v822
    %v901 = vunpack.c.l.b16 %v823
    %v902 = vunpack.c.l.b16 %v824
    %v903 = vpack.c.b16 %v872, %v871
    %v904 = vpack.c.b16 %v874, %v873
    %v905 = vpack.c.b16 %v876, %v875
    %v906 = vpack.c.b16 %v878, %v877
    %v907 = vpack.c.b16 %v880, %v879
    %v908 = vpack.c.b16 %v882, %v881
    %v909 = vpack.c.b16 %v884, %v883
    %v910 = vpack.c.b16 %v886, %v885
    %v911 = vpack.c.b16 %v888, %v887
    %v912 = vpack.c.b16 %v890, %v889
    %v913 = vpack.c.b16 %v892, %v891
    %v914 = vpack.c.b16 %v894, %v893
    %v915 = vpack.c.b16 %v896, %v895
    %v916 = vpack.c.b16 %v898, %v897
    %v917 = vpack.c.b16 %v900, %v899
    %v918 = vpack.c.b16 %v902, %v901
    %935 = vmatprep.subr.bf16.mxu0 0
    %936 = vmatpush1.bf16.msra.mxu0 %v903
    %937 = vmatprep.subr.bf16.mxu0 0
    %938 = vmatpush1.bf16.msra.mxu0 %v904
    %939 = vmatprep.subr.bf16.mxu0 0
    %940 = vmatpush1.bf16.msra.mxu0 %v905
    %941 = vmatprep.subr.bf16.mxu0 0
    %942 = vmatpush1.bf16.msra.mxu0 %v906
    %943 = vmatprep.subr.bf16.mxu0 0
    %944 = vmatpush1.bf16.msra.mxu0 %v907
    %945 = vmatprep.subr.bf16.mxu0 0
    %946 = vmatpush1.bf16.msra.mxu0 %v908
    %947 = vmatprep.subr.bf16.mxu0 0
    %948 = vmatpush1.bf16.msra.mxu0 %v909
    %949 = vmatprep.subr.bf16.mxu0 0
    %950 = vmatpush1.bf16.msra.mxu0 %v910
    %951 = vmatprep.subr.bf16.mxu0 0
    %952 = vmatpush1.bf16.msra.mxu0 %v911
    %953 = vmatprep.subr.bf16.mxu0 0
    %954 = vmatpush1.bf16.msra.mxu0 %v912
    %955 = vmatprep.subr.bf16.mxu0 0
    %956 = vmatpush1.bf16.msra.mxu0 %v913
    %957 = vmatprep.subr.bf16.mxu0 0
    %958 = vmatpush1.bf16.msra.mxu0 %v914
    %959 = vmatprep.subr.bf16.mxu0 0
    %960 = vmatpush1.bf16.msra.mxu0 %v915
    %961 = vmatprep.subr.bf16.mxu0 0
    %962 = vmatpush1.bf16.msra.mxu0 %v916
    %963 = vmatprep.subr.bf16.mxu0 0
    %964 = vmatpush1.bf16.msra.mxu0 %v917
    %965 = vmatprep.subr.bf16.mxu0 0
    %966 = vmatpush1.bf16.msra.mxu0 %v918
    %967 = vmatprep.mubr.bf16.mxu0 %v836
    %968 = vmatmul.mubr.bf16.gmra.mrb[0].mxu0 %v835
    %v969 = vpop.f32.mrb[0].mxu0
    %v970 = vadd.f32 0.0, %v969
    %v971 = vpop.f32.mrb[0].mxu0
    %v972 = vpop.f32.mrb[0].mxu0
    %v973 = vpop.f32.mrb[0].mxu0
    %974 = vdwg.mxu0
    %v975 = vadd.f32 %v215, %v970
    %v976 = vld [vmem:[%s6] sm:$0x1]
    %v978 = vlaneseq
    %v979 = vshrl.u32 %v978, 7
    %v980 = vsub.s32 0, %v979
    %v981 = vrot.slane %v976, %v980
    %v983 = vadd.f32 %v975, %v981
    %v984 = vsel %vm624, %v675, 0.0
    %985 = vadd.xlane.f32.xlu0 %v984
    %v986 = vpop.xlane.xlu0 %985
    %v987 = vsel %vm624, %v676, 0.0
    %988 = vadd.xlane.f32.xlu0 %v987
    %v989 = vpop.xlane.xlu0 %988
    %v990 = vsel %vm624, %v677, 0.0
    %991 = vadd.xlane.f32.xlu0 %v990
    %v992 = vpop.xlane.xlu0 %991
    %v993 = vsel %vm624, %v678, 0.0
    %994 = vadd.xlane.f32.xlu0 %v993
    %v995 = vpop.xlane.xlu0 %994
    %v996 = vmul.f32 %v986, 0.125
    %v997 = vmul.f32 %v989, 0.125
    %v998 = vmul.f32 %v992, 0.125
    %v999 = vmul.f32 %v995, 0.125
    %v1000 = vunpack.c.l.bf16 %v36
    %v1001 = vunpack.c.l.bf16 %v37
    %v1002 = vunpack.c.l.bf16 %v38
    %v1003 = vunpack.c.l.bf16 %v39
    %v1004 = vmul.f32 %v1000, %v996
    %v1005 = vmul.f32 %v1001, %v997
    %v1006 = vmul.f32 %v1002, %v998
    %v1007 = vmul.f32 %v1003, %v999
    %v1008 = vpack.c.bf16 %v1005, %v1004
    %v1009 = vpack.c.bf16 %v1007, %v1006
    %v1012 = vunpack.c.l.b16 %v1008
    %v1013 = vunpack.c.h.b16 %v1008
    %v1014 = vunpack.c.l.b16 %v1009
    %v1015 = vunpack.c.h.b16 %v1009
    %v1016 = vpack.c.b16 %v1012, %v1012
    %v1017 = vpack.c.b16 %v1013, %v1013
    %v1018 = vpack.c.b16 %v1014, %v1014
    %v1019 = vpack.c.b16 %v1015, %v1015
    %vm1024 = vcmask 257024
    %1025 = vst.msk [vmem:[%s9] sm:$0xf] %vm1024, %v1016
    %1026 = vst.msk [vmem:[%s9 + $0x4] sm:$0xf] %vm1024, %v1017
    %1027 = vst.msk [vmem:[%s9 + $0x8] sm:$0xf] %vm1024, %v1018
    %1028 = vst.msk [vmem:[%s9 + $0xc] sm:$0xf] %vm1024, %v1019
    %v1031 = vunpack.c.l.s4 1966171168
    %v1032 = vunpack.c.0.s8 %v1031
    %v1033 = vlaneseq
    %v1034 = vshrl.u32 %v1033, 7
    %v1035 = vsub.s32 %v1032, %v1034
    %v1036 = vrot.slane %v983, %v1035
    %v1037 = vcombine.high %v1036, %v1036
    %v1039 = vunpack.c.l.s4 1966171168
    %v1040 = vunpack.c.0.s8 %v1039
    %v1041 = vlaneseq
    %v1042 = vshrl.u32 %v1041, 7
    %v1043 = vsub.s32 %v1040, %v1042
    %v1044 = vrot.slane %v1036, %v1043
    %v1046 = vunpack.c.l.s4 1966171168
    %v1047 = vunpack.c.0.s8 %v1046
    %v1048 = vlaneseq
    %v1049 = vshrl.u32 %v1048, 7
    %v1050 = vsub.s32 %v1047, %v1049
    %v1051 = vrot.slane %v1037, %v1050
    %vm1054 = vcmask 253952
    %1055 = vst.msk [vmem:[#allocation2] sm:$0x1] %vm1054, %v1044
    %1056 = vst.msk [vmem:[#allocation2 + $0x1] sm:$0x1] %vm1054, %v1051
    // Predicated region
    $region38: #{qsca_forward.1} parent=1 // pred_check
      _
    $region39: #{qsca_forward.1} parent=1 // pred_check_branch
      %1058 = sbr.rel (0) target = $region41
    $region40: #{qsca_forward.1} parent=1 // pred_region
      _
    $region41: #{qsca_forward.1} parent=1 // pred_fallthru
      _
    // Predicated region
    $region42: #{qsca_forward.1} parent=1 // pred_check
      _
    $region43: #{qsca_forward.1} parent=1 // pred_check_branch
      %1060 = sbr.rel (0) target = $region45
    $region44: #{qsca_forward.1} parent=1 // pred_region
      %s1062 = ssub.s32 32, 32
      %1063 = vsyncadd [#allocation3], %s1062
      %s1064 = sshll.u32 [#allocation2], 4
      %s1065 = int_to_ptr.vmem [resolvable:$true] %s1064
      %1070 = dma.vmem_to_hbm [thread:$0]  %s1065, 32, %s10, [#allocation3], 16, 16, 1
    $region45: #{qsca_forward.1} parent=1 // pred_fallthru
      _
    // Predicated region
    $region46: #{qsca_forward.1} parent=1 // pred_check
      _
    $region47: #{qsca_forward.1} parent=1 // pred_check_branch
      %1072 = sbr.rel (0) target = $region49
    $region48: #{qsca_forward.1} parent=1 // pred_region
      _
    $region49: #{qsca_forward.1} parent=1 // pred_fallthru
      _
    // Predicated region
    $region50: #{qsca_forward.1} parent=1 // pred_check
      _
    $region51: #{qsca_forward.1} parent=1 // pred_check_branch
      %1074 = sbr.rel (0) target = $region53
    $region52: #{qsca_forward.1} parent=1 // pred_region
      %1075 = dma.done [#allocation3], 32
    $region53: #{qsca_forward.1} parent=1 // pred_fallthru
      _
    %1076 = vsyncpa [#allocation3], 1

</llo_original>
